<compile_context>
chip_gen: v5e
topology: v5e:2x2
jax: 0.10.0
libtpu: 0.0.40
codegen_flags: <defaults>
</compile_context>

<pallas_src>
import jax
import jax.numpy as jnp
from jax.experimental import pallas as pl
from jax.experimental.pallas import tpu as pltpu


def head_kernel(x_ref, w1_ref, b1_ref, w2_ref, b2_ref, o_ref):
    # fc1 on the MXU with f32 accumulation.
    h = jnp.dot(x_ref[...], w1_ref[...], preferred_element_type=jnp.float32)
    # Bias + ReLU on the f32 accumulator (keep elementwise work in f32).
    h = jnp.maximum(h + b1_ref[...], 0.0)
    # fc2: cast activation to the (bf16) weight dtype for the MXU, accumulate f32.
    y = jnp.dot(h.astype(w2_ref.dtype), w2_ref[...],
                preferred_element_type=jnp.float32)
    o_ref[...] = (y + b2_ref[...]).astype(o_ref.dtype)


def _round_up(x, m):
    return (x + m - 1) // m * m


def head_forward(x, w1, b1, w2, b2, *, block_b=512, compute_dtype=jnp.bfloat16):
    """x: (B, D_in); w1: (D_in, H); b1: (1, H); w2: (H, D_out); b2: (1, D_out).

    Weights are stored transposed vs PyTorch ((in, out) layout) so the kernel
    computes y = relu(x @ W1 + b1) @ W2 + b2 directly on the MXU.
    """
    B, D_in = x.shape
    H, D_out = w2.shape
    assert w1.shape == (D_in, H)
    out_dtype = x.dtype

    # --- lane-dense output: pad D_out up to a multiple of 128 ---------------
    D_out_p = _round_up(D_out, 128)
    if D_out_p != D_out:
        w2 = jnp.pad(w2, ((0, 0), (0, D_out_p - D_out)))
        b2 = jnp.pad(b2, ((0, 0), (0, D_out_p - D_out)))

    # --- batch tiling: TB multiple of 8 sublanes, B padded to multiple of TB -
    TB = _round_up(min(block_b, B), 8)
    B_pad = _round_up(B, TB)
    if B_pad != B:
        x = jnp.pad(x, ((0, B_pad - B), (0, 0)))

    # --- narrow MXU operands; keep biases f32 --------------------------------
    x_c = x.astype(compute_dtype)
    w1_c = w1.astype(compute_dtype)
    w2_c = w2.astype(compute_dtype)
    b1_f = b1.astype(jnp.float32)
    b2_f = b2.astype(jnp.float32)

    grid = (B_pad // TB,)

    flops = 2 * B_pad * (D_in * H + H * D_out_p)
    bytes_accessed = (
        x_c.size * x_c.dtype.itemsize
        + w1_c.size * w1_c.dtype.itemsize
        + w2_c.size * w2_c.dtype.itemsize
        + b1_f.size * 4
        + b2_f.size * 4
        + B_pad * D_out_p * jnp.dtype(out_dtype).itemsize
    )

    out = pl.pallas_call(
        head_kernel,
        out_shape=jax.ShapeDtypeStruct((B_pad, D_out_p), out_dtype),
        grid_spec=pltpu.PrefetchScalarGridSpec(
            num_scalar_prefetch=0,
            grid=grid,
            in_specs=[
                pl.BlockSpec((TB, D_in), lambda i: (i, 0)),      # x tile
                pl.BlockSpec((D_in, H), lambda i: (0, 0)),       # w1 (resident)
                pl.BlockSpec((1, H), lambda i: (0, 0)),          # b1 (resident)
                pl.BlockSpec((H, D_out_p), lambda i: (0, 0)),    # w2 (resident)
                pl.BlockSpec((1, D_out_p), lambda i: (0, 0)),    # b2 (resident)
            ],
            out_specs=pl.BlockSpec((TB, D_out_p), lambda i: (i, 0)),
        ),
        compiler_params=pltpu.CompilerParams(
            dimension_semantics=("parallel",),   # shard batch across TCs on v7x
            vmem_limit_bytes=64 << 20,
        ),
        cost_estimate=pl.CostEstimate(
            flops=flops, transcendentals=0, bytes_accessed=bytes_accessed),
    )(x_c, w1_c, b1_f, w2_c, b2_f)

    # Strip batch / lane padding.
    return out[:B, :D_out]


def head_reference(x, w1, b1, w2, b2, compute_dtype=jnp.bfloat16):
    """Plain-JAX reference with the same bf16-operand / f32-accumulate math."""
    h = jnp.dot(x.astype(compute_dtype), w1.astype(compute_dtype),
                preferred_element_type=jnp.float32) + b1.astype(jnp.float32)
    h = jnp.maximum(h, 0.0)
    y = jnp.dot(h.astype(compute_dtype), w2.astype(compute_dtype),
                preferred_element_type=jnp.float32) + b2.astype(jnp.float32)
    return y.astype(x.dtype)


def init_head_params(key, input_dim=512, hidden=256, output_dim=40,
                     dtype=jnp.float32):
    """Deterministic init mirroring nn.Linear's default U(-1/sqrt(fan_in), +...)."""
    k1, k2, k3, k4 = jax.random.split(key, 4)
    bound1 = 1.0 / (input_dim ** 0.5)
    bound2 = 1.0 / (hidden ** 0.5)
    # Stored as (in, out) = transpose of PyTorch's (out, in) weight layout.
    w1 = jax.random.uniform(k1, (input_dim, hidden), dtype, -bound1, bound1)
    b1 = jax.random.uniform(k2, (1, hidden), dtype, -bound1, bound1)
    w2 = jax.random.uniform(k3, (hidden, output_dim), dtype, -bound2, bound2)
    b2 = jax.random.uniform(k4, (1, output_dim), dtype, -bound2, bound2)
    return w1, b1, w2, b2


if __name__ == "__main__":
    key = jax.random.PRNGKey(0)
    kx, kp, kx2 = jax.random.split(key, 3)

    input_dim = 512
    hidden = 256
    output_dim = 40
    w1, b1, w2, b2 = init_head_params(kp, input_dim=input_dim,
                                      hidden=hidden, output_dim=output_dim)

    # --- small-shape run (single grid step) ----------------------------------
    batch = 8
    x = jax.random.normal(kx, (batch, input_dim), dtype=jnp.float32)
    out = jax.block_until_ready(head_forward(x, w1, b1, w2, b2))
    assert out.shape == (batch, output_dim), out.shape

    ref = head_reference(x, w1, b1, w2, b2)
    assert jnp.allclose(out, ref, atol=1e-2, rtol=1e-2), "mismatch vs bf16 reference"
    # Looser sanity check vs the pure-f32 PyTorch-equivalent math.
    ref_f32 = jnp.maximum(x @ w1 + b1, 0.0) @ w2 + b2
    assert jnp.allclose(out, ref_f32, atol=1e-1, rtol=1e-1), "mismatch vs f32 reference"

    # --- multi-tile run: exercises the batch grid + tail padding -------------
    batch2 = 300  # not a multiple of the tile -> padded tail tile
    x2 = jax.random.normal(kx2, (batch2, input_dim), dtype=jnp.float32)
    out2 = jax.block_until_ready(head_forward(x2, w1, b1, w2, b2, block_b=128))
    assert out2.shape == (batch2, output_dim), out2.shape
    ref2 = head_reference(x2, w1, b1, w2, b2)
    assert jnp.allclose(out2, ref2, atol=1e-2, rtol=1e-2), "mismatch (tiled) vs reference"

    print("KERNEL_OK")
</pallas_src>

<mosaic_0001>
module attributes {stable_mosaic.version = 11 : i64} {
  func.func @head_kernel(%arg0: i32, %arg1: memref<8x512xbf16, #tpu.memory_space<vmem>>, %arg2: memref<512x256xbf16, #tpu.memory_space<vmem>>, %arg3: memref<1x256xf32, #tpu.memory_space<vmem>>, %arg4: memref<256x128xbf16, #tpu.memory_space<vmem>>, %arg5: memref<1x128xf32, #tpu.memory_space<vmem>>, %arg6: memref<8x128xf32, #tpu.memory_space<vmem>>) attributes {dimension_semantics = [#tpu.dimension_semantics<parallel>], iteration_bounds = array<i64: 1>, scalar_prefetch = 0 : i64, scratch_operands = 0 : i64, tpu.core_type = #tpu.core_type<tc>, window_params = [{transform_indices = @transform_0, window_bounds = array<i64: 8, 512>}, {pipeline_mode = #tpu.pipeline_mode<synchronous>, transform_indices = @transform_1, window_bounds = array<i64: 512, 256>}, {pipeline_mode = #tpu.pipeline_mode<synchronous>, transform_indices = @transform_2, window_bounds = array<i64: 1, 256>}, {pipeline_mode = #tpu.pipeline_mode<synchronous>, transform_indices = @transform_3, window_bounds = array<i64: 256, 128>}, {pipeline_mode = #tpu.pipeline_mode<synchronous>, transform_indices = @transform_4, window_bounds = array<i64: 1, 128>}, {transform_indices = @transform_5, window_bounds = array<i64: 8, 128>}]} {
    %c0 = arith.constant 0 : index
    %c0_0 = arith.constant 0 : index
    %0 = vector.load %arg1[%c0, %c0_0] : memref<8x512xbf16, #tpu.memory_space<vmem>>, vector<8x512xbf16>
    %c0_1 = arith.constant 0 : index
    %c0_2 = arith.constant 0 : index
    %1 = vector.load %arg2[%c0_1, %c0_2] : memref<512x256xbf16, #tpu.memory_space<vmem>>, vector<512x256xbf16>
    %cst = arith.constant dense<0.000000e+00> : vector<8x256xf32>
    %2 = tpu.matmul %0, %1, %cst {dimension_numbers = #tpu.dot_dimension_numbers<[1], [0], [0], [1], [0, 0, 1, 1], [], []>} : vector<8x512xbf16>, vector<512x256xbf16>, vector<8x256xf32> -> vector<8x256xf32>
    %c0_3 = arith.constant 0 : index
    %c0_4 = arith.constant 0 : index
    %3 = vector.load %arg3[%c0_3, %c0_4] : memref<1x256xf32, #tpu.memory_space<vmem>>, vector<1x256xf32>
    %4 = vector.broadcast %3 : vector<1x256xf32> to vector<8x256xf32>
    %5 = arith.addf %2, %4 : vector<8x256xf32>
    %cst_5 = arith.constant 0.000000e+00 : f32
    %6 = vector.broadcast %cst_5 : f32 to vector<8x256xf32>
    %7 = arith.maximumf %5, %6 : vector<8x256xf32>
    %8 = arith.truncf %7 : vector<8x256xf32> to vector<8x256xbf16>
    %c0_6 = arith.constant 0 : index
    %c0_7 = arith.constant 0 : index
    %9 = vector.load %arg4[%c0_6, %c0_7] : memref<256x128xbf16, #tpu.memory_space<vmem>>, vector<256x128xbf16>
    %cst_8 = arith.constant dense<0.000000e+00> : vector<8x128xf32>
    %10 = tpu.matmul %8, %9, %cst_8 {dimension_numbers = #tpu.dot_dimension_numbers<[1], [0], [0], [1], [0, 0, 1, 1], [], []>} : vector<8x256xbf16>, vector<256x128xbf16>, vector<8x128xf32> -> vector<8x128xf32>
    %c0_9 = arith.constant 0 : index
    %c0_10 = arith.constant 0 : index
    %11 = vector.load %arg5[%c0_9, %c0_10] : memref<1x128xf32, #tpu.memory_space<vmem>>, vector<1x128xf32>
    %12 = vector.broadcast %11 : vector<1x128xf32> to vector<8x128xf32>
    %13 = arith.addf %10, %12 : vector<8x128xf32>
    %c0_11 = arith.constant 0 : index
    %c0_12 = arith.constant 0 : index
    %14 = vector.load %arg6[%c0_11, %c0_12] : memref<8x128xf32, #tpu.memory_space<vmem>>, vector<8x128xf32>
    tpu.vector_store %arg6[%c0_11, %c0_12], %13 {strides = array<i32>} : memref<8x128xf32, #tpu.memory_space<vmem>>, vector<8x128xf32>,
    return
  }
  func.func @transform_0(%arg0: i32) -> (i32, i32) {
    %c0_i32 = arith.constant 0 : i32
    %c0_i32_0 = arith.constant 0 : i32
    return %arg0, %c0_i32 : i32, i32
  }
  func.func @transform_1(%arg0: i32) -> (i32, i32) {
    %c0_i32 = arith.constant 0 : i32
    %c0_i32_0 = arith.constant 0 : i32
    %c0_i32_1 = arith.constant 0 : i32
    return %c0_i32, %c0_i32_0 : i32, i32
  }
  func.func @transform_2(%arg0: i32) -> (i32, i32) {
    %c0_i32 = arith.constant 0 : i32
    %c0_i32_0 = arith.constant 0 : i32
    %c0_i32_1 = arith.constant 0 : i32
    return %c0_i32, %c0_i32_0 : i32, i32
  }
  func.func @transform_3(%arg0: i32) -> (i32, i32) {
    %c0_i32 = arith.constant 0 : i32
    %c0_i32_0 = arith.constant 0 : i32
    %c0_i32_1 = arith.constant 0 : i32
    return %c0_i32, %c0_i32_0 : i32, i32
  }
  func.func @transform_4(%arg0: i32) -> (i32, i32) {
    %c0_i32 = arith.constant 0 : i32
    %c0_i32_0 = arith.constant 0 : i32
    %c0_i32_1 = arith.constant 0 : i32
    return %c0_i32, %c0_i32_0 : i32, i32
  }
  func.func @transform_5(%arg0: i32) -> (i32, i32) {
    %c0_i32 = arith.constant 0 : i32
    %c0_i32_0 = arith.constant 0 : i32
    return %arg0, %c0_i32 : i32, i32
  }
}

</mosaic_0001>

<llo_original>
// kernel: tpu_custom_call.1
$region0: #{tpu_custom_call.1}
  #allocation0 [shape = 'u32[]', space=smem, size = 0x4, offset = 0x4, fixed_abs, tag = 'smem constant byte address 0x4 - core index']
  #allocation1 [shape = 'u32[72,128]{1,0:T(1,128)}', space=vmem, size = 0x9000, scoped, tag = 'internal scratch']
  %s0 = inlined_call_operand.hbm [shape: bf16[8,512], index: 0, kind: input, shape index: {}]
  %s1 = inlined_call_operand.hbm [shape: bf16[512,256], index: 1, kind: input, shape index: {}]
  %s2 = inlined_call_operand.hbm [shape: f32[1,256], index: 2, kind: input, shape index: {}]
  %s3 = inlined_call_operand.hbm [shape: bf16[256,128], index: 3, kind: input, shape index: {}]
  %s4 = inlined_call_operand.vmem [shape: f32[1,128], index: 4, kind: input, shape index: {}]
  %s5 = inlined_call_operand.hbm [shape: f32[8,128], index: 5, kind: output, shape index: {}]
  %s6 = sld [smem:[#allocation0]]
  $region46: #{tpu_custom_call.1} parent=0
    _
  %s8 = ssub.s32 1, %s6
  %s9 = scalar_select 0, %s8, %s6
  $region1: #{tpu_custom_call.1} parent=0
    #allocation2 [shape = 'u8[8192]{0}', space=vmem, size = 0x2000, scoped, tag = 'input window, operand 0, single buffered']
    #allocation3 [shape = 's32[1]{0}', space=sflag, size = 0x4, scoped, tag = 'scoped memory for tpu_custom_call.1']
    #allocation4 [shape = 's32[1]{0}', space=sflag, size = 0x4, scoped, tag = 'scoped memory for tpu_custom_call.1']
    #allocation5 [shape = 'u8[262144]{0}', space=vmem, size = 0x40000, scoped, tag = 'input window, operand 1, single buffered']
    #allocation6 [shape = 's32[1]{0}', space=sflag, size = 0x4, scoped, tag = 'scoped memory for tpu_custom_call.1']
    #allocation7 [shape = 'u8[1024]{0}', space=vmem, size = 0x400, scoped, tag = 'input window, operand 2, single buffered']
    #allocation8 [shape = 'u8[65536]{0}', space=vmem, size = 0x10000, scoped, tag = 'input window, operand 3, single buffered']
    #allocation9 [shape = 's32[1]{0}', space=sflag, size = 0x4, scoped, tag = 'scoped memory for tpu_custom_call.1']
    #allocation10 [shape = 'u8[4096]{0}', space=vmem, size = 0x1000, scoped, tag = 'output window, operand 0, single buffered']
    %10 = vsyncpa [#allocation3], 0
    %11 = vsyncpa [#allocation6], 0
    %12 = vsyncpa [#allocation9], 0
    %13 = vsyncpa [#allocation4], 0
    // Predicated region
    $region2: #{tpu_custom_call.1} parent=1 // pred_check
      _
    $region3: #{tpu_custom_call.1} parent=1 // pred_check_branch
      %15 = sbr.rel (0) target = $region5
    $region4: #{tpu_custom_call.1} parent=1 // pred_region
      %17 = vsyncadd [#allocation3], 0
      %s19 = sshll.u32 %s0, 4
      %s20 = int_to_ptr.hbm [resolvable:$true] %s19
      %s21 = sshll.u32 [#allocation2], 4
      %s22 = int_to_ptr.vmem [resolvable:$true] %s21
      %24 = dma.hbm_to_vmem [thread:$0]  %s20, 256, %s22, [#allocation3]
    $region5: #{tpu_custom_call.1} parent=1 // pred_fallthru
      _
    // Predicated region
    $region6: #{tpu_custom_call.1} parent=1 // pred_check
      _
    $region7: #{tpu_custom_call.1} parent=1 // pred_check_branch
      %26 = sbr.rel (0) target = $region9
    $region8: #{tpu_custom_call.1} parent=1 // pred_region
      %28 = vsyncadd [#allocation6], 0
      %s29 = sshll.u32 %s1, 4
      %s30 = int_to_ptr.hbm [resolvable:$true] %s29
      %s31 = sshll.u32 [#allocation5], 4
      %s32 = int_to_ptr.vmem [resolvable:$true] %s31
      %37 = dma.hbm_to_vmem [thread:$0]  %s30, 8192, %s32, [#allocation6], 128, 128, 8
    $region9: #{tpu_custom_call.1} parent=1 // pred_fallthru
      _
    // Predicated region
    $region10: #{tpu_custom_call.1} parent=1 // pred_check
      _
    $region11: #{tpu_custom_call.1} parent=1 // pred_check_branch
      %39 = sbr.rel (0) target = $region13
    $region12: #{tpu_custom_call.1} parent=1 // pred_region
      %41 = vsyncadd [#allocation6], 0
      %s43 = sshll.u32 %s2, 4
      %s44 = int_to_ptr.hbm [resolvable:$true] %s43
      %s45 = sshll.u32 [#allocation7], 4
      %s46 = int_to_ptr.vmem [resolvable:$true] %s45
      %48 = dma.hbm_to_vmem [thread:$0]  %s44, 32, %s46, [#allocation6]
    $region13: #{tpu_custom_call.1} parent=1 // pred_fallthru
      _
    // Predicated region
    $region14: #{tpu_custom_call.1} parent=1 // pred_check
      _
    $region15: #{tpu_custom_call.1} parent=1 // pred_check_branch
      %50 = sbr.rel (0) target = $region17
    $region16: #{tpu_custom_call.1} parent=1 // pred_region
      %52 = vsyncadd [#allocation9], 0
      %s53 = sshll.u32 %s3, 4
      %s54 = int_to_ptr.hbm [resolvable:$true] %s53
      %s55 = sshll.u32 [#allocation8], 4
      %s56 = int_to_ptr.vmem [resolvable:$true] %s55
      %61 = dma.hbm_to_vmem [thread:$0]  %s54, 2048, %s56, [#allocation9], 64, 64, 4
    $region17: #{tpu_custom_call.1} parent=1 // pred_fallthru
      _
    // Predicated region
    $region18: #{tpu_custom_call.1} parent=1 // pred_check
      _
    $region19: #{tpu_custom_call.1} parent=1 // pred_check_branch
      %63 = sbr.rel (0) target = $region21
    $region20: #{tpu_custom_call.1} parent=1 // pred_region
      _
    $region21: #{tpu_custom_call.1} parent=1 // pred_fallthru
      _
    // Predicated region
    $region22: #{tpu_custom_call.1} parent=1 // pred_check
      _
    $region23: #{tpu_custom_call.1} parent=1 // pred_check_branch
      %65 = sbr.rel (0) target = $region25
    $region24: #{tpu_custom_call.1} parent=1 // pred_region
      %67 = dma.done [#allocation3], 256
    $region25: #{tpu_custom_call.1} parent=1 // pred_fallthru
      _
    // Predicated region
    $region26: #{tpu_custom_call.1} parent=1 // pred_check
      _
    $region27: #{tpu_custom_call.1} parent=1 // pred_check_branch
      %69 = sbr.rel (0) target = $region29
    $region28: #{tpu_custom_call.1} parent=1 // pred_region
      %71 = dma.done [#allocation6], 8192
    $region29: #{tpu_custom_call.1} parent=1 // pred_fallthru
      _
    // Predicated region
    $region30: #{tpu_custom_call.1} parent=1 // pred_check
      _
    $region31: #{tpu_custom_call.1} parent=1 // pred_check_branch
      %73 = sbr.rel (0) target = $region33
    $region32: #{tpu_custom_call.1} parent=1 // pred_region
      %75 = dma.done [#allocation6], 32
    $region33: #{tpu_custom_call.1} parent=1 // pred_fallthru
      _
    // Predicated region
    $region34: #{tpu_custom_call.1} parent=1 // pred_check
      _
    $region35: #{tpu_custom_call.1} parent=1 // pred_check_branch
      %77 = sbr.rel (0) target = $region37
    $region36: #{tpu_custom_call.1} parent=1 // pred_region
      %79 = dma.done [#allocation9], 2048
    $region37: #{tpu_custom_call.1} parent=1 // pred_fallthru
      _
    %v80 = vld [vmem:[#allocation2] sm:$0xff]
    %v81 = vld [vmem:[#allocation2 + $0x8] sm:$0xff]
    %v82 = vld [vmem:[#allocation5] sm:$0xff]
    %v83 = vld [vmem:[#allocation5 + $0x8] sm:$0xff]
    %v84 = vld [vmem:[#allocation5 + $0x10] sm:$0xff]
    %v85 = vld [vmem:[#allocation5 + $0x18] sm:$0xff]
    %v86 = vld [vmem:[#allocation5 + $0x20] sm:$0xff]
    %v87 = vld [vmem:[#allocation5 + $0x28] sm:$0xff]
    %v88 = vld [vmem:[#allocation5 + $0x30] sm:$0xff]
    %v89 = vld [vmem:[#allocation5 + $0x38] sm:$0xff]
    %v90 = vld [vmem:[#allocation5 + $0x40] sm:$0xff]
    %v91 = vld [vmem:[#allocation5 + $0x48] sm:$0xff]
    %v92 = vld [vmem:[#allocation5 + $0x50] sm:$0xff]
    %v93 = vld [vmem:[#allocation5 + $0x58] sm:$0xff]
    %v94 = vld [vmem:[#allocation5 + $0x60] sm:$0xff]
    %v95 = vld [vmem:[#allocation5 + $0x68] sm:$0xff]
    %v96 = vld [vmem:[#allocation5 + $0x70] sm:$0xff]
    %v97 = vld [vmem:[#allocation5 + $0x78] sm:$0xff]
    %v98 = vld [vmem:[#allocation5 + $0x80] sm:$0xff]
    %v99 = vld [vmem:[#allocation5 + $0x88] sm:$0xff]
    %v100 = vld [vmem:[#allocation5 + $0x90] sm:$0xff]
    %v101 = vld [vmem:[#allocation5 + $0x98] sm:$0xff]
    %v102 = vld [vmem:[#allocation5 + $0xa0] sm:$0xff]
    %v103 = vld [vmem:[#allocation5 + $0xa8] sm:$0xff]
    %v104 = vld [vmem:[#allocation5 + $0xb0] sm:$0xff]
    %v105 = vld [vmem:[#allocation5 + $0xb8] sm:$0xff]
    %v106 = vld [vmem:[#allocation5 + $0xc0] sm:$0xff]
    %v107 = vld [vmem:[#allocation5 + $0xc8] sm:$0xff]
    %v108 = vld [vmem:[#allocation5 + $0xd0] sm:$0xff]
    %v109 = vld [vmem:[#allocation5 + $0xd8] sm:$0xff]
    %v110 = vld [vmem:[#allocation5 + $0xe0] sm:$0xff]
    %v111 = vld [vmem:[#allocation5 + $0xe8] sm:$0xff]
    %v112 = vld [vmem:[#allocation5 + $0xf0] sm:$0xff]
    %v113 = vld [vmem:[#allocation5 + $0xf8] sm:$0xff]
    %v114 = vld [vmem:[#allocation5 + $0x100] sm:$0xff]
    %v115 = vld [vmem:[#allocation5 + $0x108] sm:$0xff]
    %v116 = vld [vmem:[#allocation5 + $0x110] sm:$0xff]
    %v117 = vld [vmem:[#allocation5 + $0x118] sm:$0xff]
    %v118 = vld [vmem:[#allocation5 + $0x120] sm:$0xff]
    %v119 = vld [vmem:[#allocation5 + $0x128] sm:$0xff]
    %v120 = vld [vmem:[#allocation5 + $0x130] sm:$0xff]
    %v121 = vld [vmem:[#allocation5 + $0x138] sm:$0xff]
    %v122 = vld [vmem:[#allocation5 + $0x140] sm:$0xff]
    %v123 = vld [vmem:[#allocation5 + $0x148] sm:$0xff]
    %v124 = vld [vmem:[#allocation5 + $0x150] sm:$0xff]
    %v125 = vld [vmem:[#allocation5 + $0x158] sm:$0xff]
    %v126 = vld [vmem:[#allocation5 + $0x160] sm:$0xff]
    %v127 = vld [vmem:[#allocation5 + $0x168] sm:$0xff]
    %v128 = vld [vmem:[#allocation5 + $0x170] sm:$0xff]
    %v129 = vld [vmem:[#allocation5 + $0x178] sm:$0xff]
    %v130 = vld [vmem:[#allocation5 + $0x180] sm:$0xff]
    %v131 = vld [vmem:[#allocation5 + $0x188] sm:$0xff]
    %v132 = vld [vmem:[#allocation5 + $0x190] sm:$0xff]
    %v133 = vld [vmem:[#allocation5 + $0x198] sm:$0xff]
    %v134 = vld [vmem:[#allocation5 + $0x1a0] sm:$0xff]
    %v135 = vld [vmem:[#allocation5 + $0x1a8] sm:$0xff]
    %v136 = vld [vmem:[#allocation5 + $0x1b0] sm:$0xff]
    %v137 = vld [vmem:[#allocation5 + $0x1b8] sm:$0xff]
    %v138 = vld [vmem:[#allocation5 + $0x1c0] sm:$0xff]
    %v139 = vld [vmem:[#allocation5 + $0x1c8] sm:$0xff]
    %v140 = vld [vmem:[#allocation5 + $0x1d0] sm:$0xff]
    %v141 = vld [vmem:[#allocation5 + $0x1d8] sm:$0xff]
    %v142 = vld [vmem:[#allocation5 + $0x1e0] sm:$0xff]
    %v143 = vld [vmem:[#allocation5 + $0x1e8] sm:$0xff]
    %v144 = vld [vmem:[#allocation5 + $0x1f0] sm:$0xff]
    %v145 = vld [vmem:[#allocation5 + $0x1f8] sm:$0xff]
    %v146 = vld [vmem:[#allocation7] sm:$0x3]
    %v148 = vperm.slane %v146, 0
    %v149 = vperm.slane %v146, 1
    %v154 = vunpack.c.l.b16 %v80
    %v155 = vunpack.c.h.b16 %v80
    %v156 = vunpack.c.l.b16 %v81
    %v157 = vunpack.c.h.b16 %v81
    %v158 = vpack.c.b16 %v154, %v154
    %v159 = vpack.c.b16 %v155, %v155
    %v160 = vpack.c.b16 %v156, %v156
    %v161 = vpack.c.b16 %v157, %v157
    %v230 = vunpack.c.l.b16 %v82
    %v231 = vunpack.c.h.b16 %v82
    %v232 = vunpack.c.l.b16 %v83
    %v233 = vunpack.c.h.b16 %v83
    %v234 = vunpack.c.l.b16 %v84
    %v235 = vunpack.c.h.b16 %v84
    %v236 = vunpack.c.l.b16 %v85
    %v237 = vunpack.c.h.b16 %v85
    %v238 = vunpack.c.l.b16 %v86
    %v239 = vunpack.c.h.b16 %v86
    %v240 = vunpack.c.l.b16 %v87
    %v241 = vunpack.c.h.b16 %v87
    %v242 = vunpack.c.l.b16 %v88
    %v243 = vunpack.c.h.b16 %v88
    %v244 = vunpack.c.l.b16 %v89
    %v245 = vunpack.c.h.b16 %v89
    %v246 = vunpack.c.l.b16 %v90
    %v247 = vunpack.c.h.b16 %v90
    %v248 = vunpack.c.l.b16 %v91
    %v249 = vunpack.c.h.b16 %v91
    %v250 = vunpack.c.l.b16 %v92
    %v251 = vunpack.c.h.b16 %v92
    %v252 = vunpack.c.l.b16 %v93
    %v253 = vunpack.c.h.b16 %v93
    %v254 = vunpack.c.l.b16 %v94
    %v255 = vunpack.c.h.b16 %v94
    %v256 = vunpack.c.l.b16 %v95
    %v257 = vunpack.c.h.b16 %v95
    %v258 = vunpack.c.l.b16 %v96
    %v259 = vunpack.c.h.b16 %v96
    %v260 = vunpack.c.l.b16 %v97
    %v261 = vunpack.c.h.b16 %v97
    %v262 = vunpack.c.l.b16 %v98
    %v263 = vunpack.c.h.b16 %v98
    %v264 = vunpack.c.l.b16 %v99
    %v265 = vunpack.c.h.b16 %v99
    %v266 = vunpack.c.l.b16 %v100
    %v267 = vunpack.c.h.b16 %v100
    %v268 = vunpack.c.l.b16 %v101
    %v269 = vunpack.c.h.b16 %v101
    %v270 = vunpack.c.l.b16 %v102
    %v271 = vunpack.c.h.b16 %v102
    %v272 = vunpack.c.l.b16 %v103
    %v273 = vunpack.c.h.b16 %v103
    %v274 = vunpack.c.l.b16 %v104
    %v275 = vunpack.c.h.b16 %v104
    %v276 = vunpack.c.l.b16 %v105
    %v277 = vunpack.c.h.b16 %v105
    %v278 = vunpack.c.l.b16 %v106
    %v279 = vunpack.c.h.b16 %v106
    %v280 = vunpack.c.l.b16 %v107
    %v281 = vunpack.c.h.b16 %v107
    %v282 = vunpack.c.l.b16 %v108
    %v283 = vunpack.c.h.b16 %v108
    %v284 = vunpack.c.l.b16 %v109
    %v285 = vunpack.c.h.b16 %v109
    %v286 = vunpack.c.l.b16 %v110
    %v287 = vunpack.c.h.b16 %v110
    %v288 = vunpack.c.l.b16 %v111
    %v289 = vunpack.c.h.b16 %v111
    %v290 = vunpack.c.l.b16 %v112
    %v291 = vunpack.c.h.b16 %v112
    %v292 = vunpack.c.l.b16 %v113
    %v293 = vunpack.c.h.b16 %v113
    %v294 = vunpack.c.l.b16 %v114
    %v295 = vunpack.c.h.b16 %v114
    %v296 = vunpack.c.l.b16 %v115
    %v297 = vunpack.c.h.b16 %v115
    %v298 = vunpack.c.l.b16 %v116
    %v299 = vunpack.c.h.b16 %v116
    %v300 = vunpack.c.l.b16 %v117
    %v301 = vunpack.c.h.b16 %v117
    %v302 = vunpack.c.l.b16 %v118
    %v303 = vunpack.c.h.b16 %v118
    %v304 = vunpack.c.l.b16 %v119
    %v305 = vunpack.c.h.b16 %v119
    %v306 = vunpack.c.l.b16 %v120
    %v307 = vunpack.c.h.b16 %v120
    %v308 = vunpack.c.l.b16 %v121
    %v309 = vunpack.c.h.b16 %v121
    %v310 = vunpack.c.l.b16 %v122
    %v311 = vunpack.c.h.b16 %v122
    %v312 = vunpack.c.l.b16 %v123
    %v313 = vunpack.c.h.b16 %v123
    %v314 = vunpack.c.l.b16 %v124
    %v315 = vunpack.c.h.b16 %v124
    %v316 = vunpack.c.l.b16 %v125
    %v317 = vunpack.c.h.b16 %v125
    %v318 = vunpack.c.l.b16 %v126
    %v319 = vunpack.c.h.b16 %v126
    %v320 = vunpack.c.l.b16 %v127
    %v321 = vunpack.c.h.b16 %v127
    %v322 = vunpack.c.l.b16 %v128
    %v323 = vunpack.c.h.b16 %v128
    %v324 = vunpack.c.l.b16 %v129
    %v325 = vunpack.c.h.b16 %v129
    %v326 = vunpack.c.l.b16 %v130
    %v327 = vunpack.c.h.b16 %v130
    %v328 = vunpack.c.l.b16 %v131
    %v329 = vunpack.c.h.b16 %v131
    %v330 = vunpack.c.l.b16 %v132
    %v331 = vunpack.c.h.b16 %v132
    %v332 = vunpack.c.l.b16 %v133
    %v333 = vunpack.c.h.b16 %v133
    %v334 = vunpack.c.l.b16 %v134
    %v335 = vunpack.c.h.b16 %v134
    %v336 = vunpack.c.l.b16 %v135
    %v337 = vunpack.c.h.b16 %v135
    %v338 = vunpack.c.l.b16 %v136
    %v339 = vunpack.c.h.b16 %v136
    %v340 = vunpack.c.l.b16 %v137
    %v341 = vunpack.c.h.b16 %v137
    %v342 = vunpack.c.l.b16 %v138
    %v343 = vunpack.c.h.b16 %v138
    %v344 = vunpack.c.l.b16 %v139
    %v345 = vunpack.c.h.b16 %v139
    %v346 = vunpack.c.l.b16 %v140
    %v347 = vunpack.c.h.b16 %v140
    %v348 = vunpack.c.l.b16 %v141
    %v349 = vunpack.c.h.b16 %v141
    %v350 = vunpack.c.l.b16 %v142
    %v351 = vunpack.c.h.b16 %v142
    %v352 = vunpack.c.l.b16 %v143
    %v353 = vunpack.c.h.b16 %v143
    %v354 = vunpack.c.l.b16 %v144
    %v355 = vunpack.c.h.b16 %v144
    %v356 = vunpack.c.l.b16 %v145
    %v357 = vunpack.c.h.b16 %v145
    %v358 = vpack.c.b16 %v232, %v230
    %v359 = vpack.c.b16 %v233, %v231
    %v360 = vpack.c.b16 %v236, %v234
    %v361 = vpack.c.b16 %v237, %v235
    %v362 = vpack.c.b16 %v240, %v238
    %v363 = vpack.c.b16 %v241, %v239
    %v364 = vpack.c.b16 %v244, %v242
    %v365 = vpack.c.b16 %v245, %v243
    %v366 = vpack.c.b16 %v248, %v246
    %v367 = vpack.c.b16 %v249, %v247
    %v368 = vpack.c.b16 %v252, %v250
    %v369 = vpack.c.b16 %v253, %v251
    %v370 = vpack.c.b16 %v256, %v254
    %v371 = vpack.c.b16 %v257, %v255
    %v372 = vpack.c.b16 %v260, %v258
    %v373 = vpack.c.b16 %v261, %v259
    %v374 = vpack.c.b16 %v264, %v262
    %v375 = vpack.c.b16 %v265, %v263
    %v376 = vpack.c.b16 %v268, %v266
    %v377 = vpack.c.b16 %v269, %v267
    %v378 = vpack.c.b16 %v272, %v270
    %v379 = vpack.c.b16 %v273, %v271
    %v380 = vpack.c.b16 %v276, %v274
    %v381 = vpack.c.b16 %v277, %v275
    %v382 = vpack.c.b16 %v280, %v278
    %v383 = vpack.c.b16 %v281, %v279
    %v384 = vpack.c.b16 %v284, %v282
    %v385 = vpack.c.b16 %v285, %v283
    %v386 = vpack.c.b16 %v288, %v286
    %v387 = vpack.c.b16 %v289, %v287
    %v388 = vpack.c.b16 %v292, %v290
    %v389 = vpack.c.b16 %v293, %v291
    %v390 = vpack.c.b16 %v296, %v294
    %v391 = vpack.c.b16 %v297, %v295
    %v392 = vpack.c.b16 %v300, %v298
    %v393 = vpack.c.b16 %v301, %v299
    %v394 = vpack.c.b16 %v304, %v302
    %v395 = vpack.c.b16 %v305, %v303
    %v396 = vpack.c.b16 %v308, %v306
    %v397 = vpack.c.b16 %v309, %v307
    %v398 = vpack.c.b16 %v312, %v310
    %v399 = vpack.c.b16 %v313, %v311
    %v400 = vpack.c.b16 %v316, %v314
    %v401 = vpack.c.b16 %v317, %v315
    %v402 = vpack.c.b16 %v320, %v318
    %v403 = vpack.c.b16 %v321, %v319
    %v404 = vpack.c.b16 %v324, %v322
    %v405 = vpack.c.b16 %v325, %v323
    %v406 = vpack.c.b16 %v328, %v326
    %v407 = vpack.c.b16 %v329, %v327
    %v408 = vpack.c.b16 %v332, %v330
    %v409 = vpack.c.b16 %v333, %v331
    %v410 = vpack.c.b16 %v336, %v334
    %v411 = vpack.c.b16 %v337, %v335
    %v412 = vpack.c.b16 %v340, %v338
    %v413 = vpack.c.b16 %v341, %v339
    %v414 = vpack.c.b16 %v344, %v342
    %v415 = vpack.c.b16 %v345, %v343
    %v416 = vpack.c.b16 %v348, %v346
    %v417 = vpack.c.b16 %v349, %v347
    %v418 = vpack.c.b16 %v352, %v350
    %v419 = vpack.c.b16 %v353, %v351
    %v420 = vpack.c.b16 %v356, %v354
    %v421 = vpack.c.b16 %v357, %v355
    %486 = vmatpush.bf16.msra.mxu0 %v372
    %487 = vmatpush.bf16.msra.mxu0 %v370
    %488 = vmatpush.bf16.msra.mxu0 %v368
    %489 = vmatpush.bf16.msra.mxu0 %v366
    %490 = vmatpush.bf16.msra.mxu0 %v364
    %491 = vmatpush.bf16.msra.mxu0 %v362
    %492 = vmatpush.bf16.msra.mxu0 %v360
    %493 = vmatpush.bf16.msra.mxu0 %v358
    %494 = vmatmul.bf16.gmra.mxu0 %v158
    %v495 = vpop.f32.mrf.mxu0
    %v496 = vadd.f32 %v148, %v495
    %v497 = vpop.f32.mrf.mxu0
    %498 = vdwg.mxu0
    %499 = vmatpush.bf16.msra.mxu0 %v388
    %500 = vmatpush.bf16.msra.mxu0 %v386
    %501 = vmatpush.bf16.msra.mxu0 %v384
    %502 = vmatpush.bf16.msra.mxu0 %v382
    %503 = vmatpush.bf16.msra.mxu0 %v380
    %504 = vmatpush.bf16.msra.mxu0 %v378
    %505 = vmatpush.bf16.msra.mxu0 %v376
    %506 = vmatpush.bf16.msra.mxu0 %v374
    %507 = vmatmul.bf16.gmra.mxu0 %v159
    %v508 = vpop.f32.mrf.mxu0
    %v509 = vadd.f32 %v496, %v508
    %v510 = vpop.f32.mrf.mxu0
    %511 = vdwg.mxu0
    %512 = vmatpush.bf16.msra.mxu0 %v404
    %513 = vmatpush.bf16.msra.mxu0 %v402
    %514 = vmatpush.bf16.msra.mxu0 %v400
    %515 = vmatpush.bf16.msra.mxu0 %v398
    %516 = vmatpush.bf16.msra.mxu0 %v396
    %517 = vmatpush.bf16.msra.mxu0 %v394
    %518 = vmatpush.bf16.msra.mxu0 %v392
    %519 = vmatpush.bf16.msra.mxu0 %v390
    %520 = vmatmul.bf16.gmra.mxu0 %v160
    %v521 = vpop.f32.mrf.mxu0
    %v522 = vadd.f32 %v509, %v521
    %v523 = vpop.f32.mrf.mxu0
    %524 = vdwg.mxu0
    %525 = vmatpush.bf16.msra.mxu0 %v420
    %526 = vmatpush.bf16.msra.mxu0 %v418
    %527 = vmatpush.bf16.msra.mxu0 %v416
    %528 = vmatpush.bf16.msra.mxu0 %v414
    %529 = vmatpush.bf16.msra.mxu0 %v412
    %530 = vmatpush.bf16.msra.mxu0 %v410
    %531 = vmatpush.bf16.msra.mxu0 %v408
    %532 = vmatpush.bf16.msra.mxu0 %v406
    %533 = vmatmul.bf16.gmra.mxu0 %v161
    %v534 = vpop.f32.mrf.mxu0
    %v535 = vadd.f32 %v522, %v534
    %v536 = vpop.f32.mrf.mxu0
    %537 = vdwg.mxu0
    %538 = vmatpush.bf16.msra.mxu0 %v373
    %539 = vmatpush.bf16.msra.mxu0 %v371
    %540 = vmatpush.bf16.msra.mxu0 %v369
    %541 = vmatpush.bf16.msra.mxu0 %v367
    %542 = vmatpush.bf16.msra.mxu0 %v365
    %543 = vmatpush.bf16.msra.mxu0 %v363
    %544 = vmatpush.bf16.msra.mxu0 %v361
    %545 = vmatpush.bf16.msra.mxu0 %v359
    %546 = vmatmul.bf16.gmra.mxu0 %v158
    %v547 = vpop.f32.mrf.mxu0
    %v548 = vadd.f32 %v149, %v547
    %v549 = vpop.f32.mrf.mxu0
    %550 = vdwg.mxu0
    %551 = vmatpush.bf16.msra.mxu0 %v389
    %552 = vmatpush.bf16.msra.mxu0 %v387
    %553 = vmatpush.bf16.msra.mxu0 %v385
    %554 = vmatpush.bf16.msra.mxu0 %v383
    %555 = vmatpush.bf16.msra.mxu0 %v381
    %556 = vmatpush.bf16.msra.mxu0 %v379
    %557 = vmatpush.bf16.msra.mxu0 %v377
    %558 = vmatpush.bf16.msra.mxu0 %v375
    %559 = vmatmul.bf16.gmra.mxu0 %v159
    %v560 = vpop.f32.mrf.mxu0
    %v561 = vadd.f32 %v548, %v560
    %v562 = vpop.f32.mrf.mxu0
    %563 = vdwg.mxu0
    %564 = vmatpush.bf16.msra.mxu0 %v405
    %565 = vmatpush.bf16.msra.mxu0 %v403
    %566 = vmatpush.bf16.msra.mxu0 %v401
    %567 = vmatpush.bf16.msra.mxu0 %v399
    %568 = vmatpush.bf16.msra.mxu0 %v397
    %569 = vmatpush.bf16.msra.mxu0 %v395
    %570 = vmatpush.bf16.msra.mxu0 %v393
    %571 = vmatpush.bf16.msra.mxu0 %v391
    %572 = vmatmul.bf16.gmra.mxu0 %v160
    %v573 = vpop.f32.mrf.mxu0
    %v574 = vadd.f32 %v561, %v573
    %v575 = vpop.f32.mrf.mxu0
    %576 = vdwg.mxu0
    %577 = vmatpush.bf16.msra.mxu0 %v421
    %578 = vmatpush.bf16.msra.mxu0 %v419
    %579 = vmatpush.bf16.msra.mxu0 %v417
    %580 = vmatpush.bf16.msra.mxu0 %v415
    %581 = vmatpush.bf16.msra.mxu0 %v413
    %582 = vmatpush.bf16.msra.mxu0 %v411
    %583 = vmatpush.bf16.msra.mxu0 %v409
    %584 = vmatpush.bf16.msra.mxu0 %v407
    %585 = vmatmul.bf16.gmra.mxu0 %v161
    %v586 = vpop.f32.mrf.mxu0
    %v587 = vadd.f32 %v574, %v586
    %v588 = vpop.f32.mrf.mxu0
    %589 = vdwg.mxu0
    %v590 = vmax.f32 %v535, 0.0
    %v591 = vmax.f32 %v587, 0.0
    %v592 = vpack.c.bf16 %v590, %v590
    %v593 = vpack.c.bf16 %v591, %v591
    %v594 = vld [vmem:[#allocation8] sm:$0xf]
    %v595 = vld [vmem:[#allocation8 + $0x4] sm:$0xf]
    %v596 = vld [vmem:[#allocation8 + $0x8] sm:$0xf]
    %v597 = vld [vmem:[#allocation8 + $0xc] sm:$0xf]
    %v598 = vld [vmem:[#allocation8 + $0x10] sm:$0xf]
    %v599 = vld [vmem:[#allocation8 + $0x14] sm:$0xf]
    %v600 = vld [vmem:[#allocation8 + $0x18] sm:$0xf]
    %v601 = vld [vmem:[#allocation8 + $0x1c] sm:$0xf]
    %v602 = vld [vmem:[#allocation8 + $0x20] sm:$0xf]
    %v603 = vld [vmem:[#allocation8 + $0x24] sm:$0xf]
    %v604 = vld [vmem:[#allocation8 + $0x28] sm:$0xf]
    %v605 = vld [vmem:[#allocation8 + $0x2c] sm:$0xf]
    %v606 = vld [vmem:[#allocation8 + $0x30] sm:$0xf]
    %v607 = vld [vmem:[#allocation8 + $0x34] sm:$0xf]
    %v608 = vld [vmem:[#allocation8 + $0x38] sm:$0xf]
    %v609 = vld [vmem:[#allocation8 + $0x3c] sm:$0xf]
    %v610 = vld [vmem:[#allocation8 + $0x40] sm:$0xf]
    %v611 = vld [vmem:[#allocation8 + $0x44] sm:$0xf]
    %v612 = vld [vmem:[#allocation8 + $0x48] sm:$0xf]
    %v613 = vld [vmem:[#allocation8 + $0x4c] sm:$0xf]
    %v614 = vld [vmem:[#allocation8 + $0x50] sm:$0xf]
    %v615 = vld [vmem:[#allocation8 + $0x54] sm:$0xf]
    %v616 = vld [vmem:[#allocation8 + $0x58] sm:$0xf]
    %v617 = vld [vmem:[#allocation8 + $0x5c] sm:$0xf]
    %v618 = vld [vmem:[#allocation8 + $0x60] sm:$0xf]
    %v619 = vld [vmem:[#allocation8 + $0x64] sm:$0xf]
    %v620 = vld [vmem:[#allocation8 + $0x68] sm:$0xf]
    %v621 = vld [vmem:[#allocation8 + $0x6c] sm:$0xf]
    %v622 = vld [vmem:[#allocation8 + $0x70] sm:$0xf]
    %v623 = vld [vmem:[#allocation8 + $0x74] sm:$0xf]
    %v624 = vld [vmem:[#allocation8 + $0x78] sm:$0xf]
    %v625 = vld [vmem:[#allocation8 + $0x7c] sm:$0xf]
    %v626 = vld [vmem:[%s4] sm:$0x1]
    %v628 = vperm.slane %v626, 0
    %v662 = vunpack.c.l.b16 %v594
    %v663 = vunpack.c.l.b16 %v595
    %v664 = vunpack.c.l.b16 %v596
    %v665 = vunpack.c.l.b16 %v597
    %v666 = vunpack.c.l.b16 %v598
    %v667 = vunpack.c.l.b16 %v599
    %v668 = vunpack.c.l.b16 %v600
    %v669 = vunpack.c.l.b16 %v601
    %v670 = vunpack.c.l.b16 %v602
    %v671 = vunpack.c.l.b16 %v603
    %v672 = vunpack.c.l.b16 %v604
    %v673 = vunpack.c.l.b16 %v605
    %v674 = vunpack.c.l.b16 %v606
    %v675 = vunpack.c.l.b16 %v607
    %v676 = vunpack.c.l.b16 %v608
    %v677 = vunpack.c.l.b16 %v609
    %v678 = vunpack.c.l.b16 %v610
    %v679 = vunpack.c.l.b16 %v611
    %v680 = vunpack.c.l.b16 %v612
    %v681 = vunpack.c.l.b16 %v613
    %v682 = vunpack.c.l.b16 %v614
    %v683 = vunpack.c.l.b16 %v615
    %v684 = vunpack.c.l.b16 %v616
    %v685 = vunpack.c.l.b16 %v617
    %v686 = vunpack.c.l.b16 %v618
    %v687 = vunpack.c.l.b16 %v619
    %v688 = vunpack.c.l.b16 %v620
    %v689 = vunpack.c.l.b16 %v621
    %v690 = vunpack.c.l.b16 %v622
    %v691 = vunpack.c.l.b16 %v623
    %v692 = vunpack.c.l.b16 %v624
    %v693 = vunpack.c.l.b16 %v625
    %v694 = vpack.c.b16 %v663, %v662
    %v695 = vpack.c.b16 %v665, %v664
    %v696 = vpack.c.b16 %v667, %v666
    %v697 = vpack.c.b16 %v669, %v668
    %v698 = vpack.c.b16 %v671, %v670
    %v699 = vpack.c.b16 %v673, %v672
    %v700 = vpack.c.b16 %v675, %v674
    %v701 = vpack.c.b16 %v677, %v676
    %v702 = vpack.c.b16 %v679, %v678
    %v703 = vpack.c.b16 %v681, %v680
    %v704 = vpack.c.b16 %v683, %v682
    %v705 = vpack.c.b16 %v685, %v684
    %v706 = vpack.c.b16 %v687, %v686
    %v707 = vpack.c.b16 %v689, %v688
    %v708 = vpack.c.b16 %v691, %v690
    %v709 = vpack.c.b16 %v693, %v692
    %726 = vmatpush.bf16.msra.mxu0 %v701
    %727 = vmatpush.bf16.msra.mxu0 %v700
    %728 = vmatpush.bf16.msra.mxu0 %v699
    %729 = vmatpush.bf16.msra.mxu0 %v698
    %730 = vmatpush.bf16.msra.mxu0 %v697
    %731 = vmatpush.bf16.msra.mxu0 %v696
    %732 = vmatpush.bf16.msra.mxu0 %v695
    %733 = vmatpush.bf16.msra.mxu0 %v694
    %734 = vmatmul.bf16.gmra.mxu0 %v592
    %v735 = vpop.f32.mrf.mxu0
    %v736 = vadd.f32 %v628, %v735
    %v737 = vpop.f32.mrf.mxu0
    %738 = vdwg.mxu0
    %739 = vmatpush.bf16.msra.mxu0 %v709
    %740 = vmatpush.bf16.msra.mxu0 %v708
    %741 = vmatpush.bf16.msra.mxu0 %v707
    %742 = vmatpush.bf16.msra.mxu0 %v706
    %743 = vmatpush.bf16.msra.mxu0 %v705
    %744 = vmatpush.bf16.msra.mxu0 %v704
    %745 = vmatpush.bf16.msra.mxu0 %v703
    %746 = vmatpush.bf16.msra.mxu0 %v702
    %747 = vmatmul.bf16.gmra.mxu0 %v593
    %v748 = vpop.f32.mrf.mxu0
    %v749 = vadd.f32 %v736, %v748
    %v750 = vpop.f32.mrf.mxu0
    %751 = vdwg.mxu0
    %752 = vst [vmem:[#allocation10] sm:$0xff] %v749
    // Predicated region
    $region38: #{tpu_custom_call.1} parent=1 // pred_check
      _
    $region39: #{tpu_custom_call.1} parent=1 // pred_check_branch
      %754 = sbr.rel (0) target = $region41
    $region40: #{tpu_custom_call.1} parent=1 // pred_region
      %756 = vsyncadd [#allocation4], 0
      %s758 = sshll.u32 [#allocation10], 4
      %s759 = int_to_ptr.vmem [resolvable:$true] %s758
      %s760 = sshll.u32 %s5, 4
      %s761 = int_to_ptr.hbm [resolvable:$true] %s760
      %763 = dma.vmem_to_hbm [thread:$0]  %s759, 128, %s761, [#allocation4]
    $region41: #{tpu_custom_call.1} parent=1 // pred_fallthru
      _
    // Predicated region
    $region42: #{tpu_custom_call.1} parent=1 // pred_check
      _
    $region43: #{tpu_custom_call.1} parent=1 // pred_check_branch
      %765 = sbr.rel (0) target = $region45
    $region44: #{tpu_custom_call.1} parent=1 // pred_region
      %767 = dma.done [#allocation4], 128
    $region45: #{tpu_custom_call.1} parent=1 // pred_fallthru
      _
    %768 = vsyncpa [#allocation3], 1
    %769 = vsyncpa [#allocation6], 1
    %770 = vsyncpa [#allocation9], 1
    %771 = vsyncpa [#allocation4], 1

</llo_original>
